<compile_context>
chip_gen: v5e
topology: v5e:2x2
jax: 0.10.0
libtpu: 0.0.40
codegen_flags: <defaults>
</compile_context>

<pallas_src>
import math

import jax
import jax.numpy as jnp
from jax.experimental import pallas as pl
from jax.experimental.pallas import tpu as pltpu

_LANE = 128
_SUBLANE = 8


def _round_up(n, m):
    return ((n + m - 1) // m) * m


def _fourier_kernel(x_ref, w_ref, phase_ref, o_ref):
    # MXU matmul (f32 accumulation) + broadcast phase add (VPU) + single sin
    # (EUP) + ONE full-tile lane-dense store.  No concat, no masked stores.
    proj = jnp.dot(x_ref[...], w_ref[...], preferred_element_type=jnp.float32)
    o_ref[...] = jnp.sin(proj + phase_ref[...]).astype(o_ref.dtype)


def _pick_batch_tile(n_rows, bytes_per_row, *, budget_bytes, max_rows):
    """Batch tile: multiple of 8 (or full dim), VMEM-bounded, >=2 grid blocks."""
    if n_rows <= _SUBLANE:
        return n_rows                       # full (small) dim is always legal
    t = max(_SUBLANE, budget_bytes // max(bytes_per_row, 1))
    t = min(t, max_rows, n_rows)
    # Keep at least 2 (4 for big inputs) grid blocks so v7x's two TensorCores
    # both get work under dimension_semantics=("parallel",).
    min_blocks = 4 if n_rows >= 2048 else 2
    if n_rows >= min_blocks * _SUBLANE:
        t = min(t, _round_up(pl.cdiv(n_rows, min_blocks), _SUBLANE))
    return max(_SUBLANE, (t // _SUBLANE) * _SUBLANE)


def fourier_feature_projection(x, weight, *, max_block_rows=8192,
                               vmem_budget_bytes=12 * 1024 * 1024,
                               out_dtype=None):
    """x: [B, input_dim], weight: [input_dim, output_dim//2] -> [B, output_dim].

    out[:, :half] = sin(x @ W), out[:, half:] = cos(x @ W)  (PyTorch concat order).
    """
    B, d_in = x.shape
    d_in_w, half = weight.shape
    assert d_in == d_in_w, (d_in, d_in_w)
    out_dim = 2 * half
    out_dtype = x.dtype if out_dtype is None else out_dtype
    compute_dtype = jnp.float32  # keep phases in f32 (scale=10 weights)

    # [W | W] and the matching 0 / pi/2 phase row (cos(t) = sin(t + pi/2)).
    w_cat = jnp.concatenate([weight, weight], axis=-1).astype(compute_dtype)
    half_phase = jnp.concatenate([
        jnp.zeros((half,), compute_dtype),
        jnp.full((half,), math.pi / 2, dtype=compute_dtype),
    ])

    # Fold r batch rows into lanes when d_in is small (d_in | 128): x tile and
    # output tile become lane-dense and the MXU sees a full K = 128.
    r = 1
    if d_in < _LANE and _LANE % d_in == 0:
        r_cand = _LANE // d_in
        if r_cand * out_dim <= 4096:        # keep block-diagonal weight small
            r = r_cand

    if r > 1:
        B_pad = _round_up(B, r)
        x_k = x if B_pad == B else jnp.pad(x, ((0, B_pad - B), (0, 0)))
        x_k = x_k.reshape(B_pad // r, r * d_in).astype(compute_dtype)
        eye = jnp.eye(r, dtype=compute_dtype)
        # Block-diagonal weight: block (j, j) of size [d_in, out_dim] is [W | W].
        w_k = jnp.einsum("ij,kl->ikjl", eye, w_cat).reshape(r * d_in, r * out_dim)
        phase_k = jnp.tile(half_phase, r)[None, :]
    else:
        B_pad = B
        x_k = x.astype(compute_dtype)
        w_k = w_cat
        phase_k = half_phase[None, :]

    n_rows, K = x_k.shape
    N = w_k.shape[1]

    # VMEM-budgeted batch tile (double-buffered x tile + out tile, f32,
    # lane-padded footprint), multiple of 8, >= 2 grid blocks when possible.
    K_pad = _round_up(K, _LANE)
    N_pad = _round_up(N, _LANE)
    bytes_per_row = 2 * 4 * (K_pad + N_pad)
    tb = _pick_batch_tile(n_rows, bytes_per_row,
                          budget_bytes=vmem_budget_bytes,
                          max_rows=max_block_rows)
    num_blocks = pl.cdiv(n_rows, tb)

    est_vmem = (bytes_per_row * tb          # x + out tiles, double buffered
                + 2 * 4 * K_pad * N_pad     # resident weight (headroom x2)
                + 2 * 4 * N_pad             # phase row
                + (1 << 20))                # slack
    vmem_limit = int(min(max(2 * est_vmem, 32 * 1024 * 1024),
                         64 * 1024 * 1024))

    cost = pl.CostEstimate(
        flops=2 * n_rows * K * N,
        transcendentals=n_rows * N,
        bytes_accessed=4 * (n_rows * K + K * N + N + n_rows * N),
    )

    out_k = pl.pallas_call(
        _fourier_kernel,
        out_shape=jax.ShapeDtypeStruct((n_rows, N), out_dtype),
        grid_spec=pl.GridSpec(
            grid=(num_blocks,),
            in_specs=[
                pl.BlockSpec((tb, K), lambda i: (i, 0)),   # x batch tile
                pl.BlockSpec((K, N), lambda i: (0, 0)),    # weight: VMEM-resident
                pl.BlockSpec((1, N), lambda i: (0, 0)),    # phase: VMEM-resident
            ],
            out_specs=pl.BlockSpec((tb, N), lambda i: (i, 0)),
        ),
        compiler_params=pltpu.CompilerParams(
            dimension_semantics=("parallel",),   # megacore sharding on v7x
            vmem_limit_bytes=vmem_limit,
        ),
        cost_estimate=cost,
    )(x_k, w_k, phase_k)

    if r > 1:
        out = out_k.reshape(B_pad, out_dim)[:B]   # free reshape; slice off pad
    else:
        out = out_k
    return out


def _reference(x, weight):
    proj = x @ weight
    return jnp.concatenate([jnp.sin(proj), jnp.cos(proj)], axis=-1)


def _check(out, ref, label):
    assert out.shape == ref.shape, (label, out.shape, ref.shape)
    assert jnp.allclose(out, ref, atol=5e-4, rtol=1e-4), (
        f"{label}: max abs diff {jnp.max(jnp.abs(out - ref))}")


if __name__ == "__main__":
    key = jax.random.PRNGKey(0)
    kx1, kw1, kx2, kx3, kw3 = jax.random.split(key, 5)

    # Case 1: the module's shipped config (folded path, d_in=16, half=32).
    input_dim, output_dim, scale, batch = 16, 64, 10.0, 8
    x1 = jax.random.normal(kx1, (batch, input_dim), dtype=jnp.float32)
    w1 = jax.random.normal(kw1, (input_dim, output_dim // 2), dtype=jnp.float32) * scale
    out1 = jax.block_until_ready(fourier_feature_projection(x1, w1))
    _check(out1, _reference(x1, w1), "folded single-block")

    # Case 2: folded path, batch not a multiple of the fold factor, tiny tiles
    # (exercises multi-block grid + partial last block + pad/slice).
    batch2 = 203
    x2 = jax.random.normal(kx2, (batch2, input_dim), dtype=jnp.float32)
    out2 = jax.block_until_ready(
        fourier_feature_projection(x2, w1, max_block_rows=8))
    _check(out2, _reference(x2, w1), "folded multi-block")

    # Case 3: plain (unfolded) path: d_in does not divide 128.
    d_in3, half3, batch3 = 56, 80, 64
    x3 = jax.random.normal(kx3, (batch3, d_in3), dtype=jnp.float32)
    w3 = jax.random.normal(kw3, (d_in3, half3), dtype=jnp.float32) * scale
    out3 = jax.block_until_ready(fourier_feature_projection(x3, w3))
    _check(out3, _reference(x3, w3), "plain path")

    print("KERNEL_OK")
</pallas_src>

<mosaic_0001>
module attributes {stable_mosaic.version = 11 : i64} {
  func.func @_fourier_kernel(%arg0: i32, %arg1: memref<1x128xf32, #tpu.memory_space<vmem>>, %arg2: memref<128x512xf32, #tpu.memory_space<vmem>>, %arg3: memref<1x512xf32, #tpu.memory_space<vmem>>, %arg4: memref<1x512xf32, #tpu.memory_space<vmem>>) attributes {dimension_semantics = [#tpu.dimension_semantics<parallel>], iteration_bounds = array<i64: 1>, scalar_prefetch = 0 : i64, scratch_operands = 0 : i64, tpu.core_type = #tpu.core_type<tc>, window_params = [{transform_indices = @transform_0, window_bounds = array<i64: 1, 128>}, {pipeline_mode = #tpu.pipeline_mode<synchronous>, transform_indices = @transform_1, window_bounds = array<i64: 128, 512>}, {pipeline_mode = #tpu.pipeline_mode<synchronous>, transform_indices = @transform_2, window_bounds = array<i64: 1, 512>}, {transform_indices = @transform_3, window_bounds = array<i64: 1, 512>}]} {
    %c0 = arith.constant 0 : index
    %c0_0 = arith.constant 0 : index
    %0 = vector.load %arg1[%c0, %c0_0] : memref<1x128xf32, #tpu.memory_space<vmem>>, vector<1x128xf32>
    %c0_1 = arith.constant 0 : index
    %c0_2 = arith.constant 0 : index
    %1 = vector.load %arg2[%c0_1, %c0_2] : memref<128x512xf32, #tpu.memory_space<vmem>>, vector<128x512xf32>
    %cst = arith.constant dense<0.000000e+00> : vector<1x512xf32>
    %2 = tpu.matmul %0, %1, %cst {dimension_numbers = #tpu.dot_dimension_numbers<[1], [0], [0], [1], [0, 0, 1, 1], [], []>} : vector<1x128xf32>, vector<128x512xf32>, vector<1x512xf32> -> vector<1x512xf32>
    %c0_3 = arith.constant 0 : index
    %c0_4 = arith.constant 0 : index
    %3 = vector.load %arg3[%c0_3, %c0_4] : memref<1x512xf32, #tpu.memory_space<vmem>>, vector<1x512xf32>
    %4 = arith.addf %2, %3 : vector<1x512xf32>
    %5 = math.sin %4 : vector<1x512xf32>
    %c0_5 = arith.constant 0 : index
    %c0_6 = arith.constant 0 : index
    %6 = vector.load %arg4[%c0_5, %c0_6] : memref<1x512xf32, #tpu.memory_space<vmem>>, vector<1x512xf32>
    tpu.vector_store %arg4[%c0_5, %c0_6], %5 {strides = array<i32>} : memref<1x512xf32, #tpu.memory_space<vmem>>, vector<1x512xf32>,
    return
  }
  func.func @transform_0(%arg0: i32) -> (i32, i32) {
    %c0_i32 = arith.constant 0 : i32
    %c0_i32_0 = arith.constant 0 : i32
    return %arg0, %c0_i32 : i32, i32
  }
  func.func @transform_1(%arg0: i32) -> (i32, i32) {
    %c0_i32 = arith.constant 0 : i32
    %c0_i32_0 = arith.constant 0 : i32
    %c0_i32_1 = arith.constant 0 : i32
    return %c0_i32, %c0_i32_0 : i32, i32
  }
  func.func @transform_2(%arg0: i32) -> (i32, i32) {
    %c0_i32 = arith.constant 0 : i32
    %c0_i32_0 = arith.constant 0 : i32
    %c0_i32_1 = arith.constant 0 : i32
    return %c0_i32, %c0_i32_0 : i32, i32
  }
  func.func @transform_3(%arg0: i32) -> (i32, i32) {
    %c0_i32 = arith.constant 0 : i32
    %c0_i32_0 = arith.constant 0 : i32
    return %arg0, %c0_i32 : i32, i32
  }
}

</mosaic_0001>

<llo_original>
// kernel: tpu_custom_call.1
$region0: #{tpu_custom_call.1}
  #allocation0 [shape = 'u32[]', space=smem, size = 0x4, offset = 0x4, fixed_abs, tag = 'smem constant byte address 0x4 - core index']
  #allocation1 [shape = 'u32[72,128]{1,0:T(1,128)}', space=vmem, size = 0x9000, scoped, tag = 'internal scratch']
  %s0 = inlined_call_operand.hbm [shape: f32[1,128], index: 0, kind: input, shape index: {}]
  %s1 = inlined_call_operand.hbm [shape: f32[128,512], index: 1, kind: input, shape index: {}]
  %s2 = inlined_call_operand.hbm [shape: f32[1,512], index: 2, kind: input, shape index: {}]
  %s3 = inlined_call_operand.hbm [shape: f32[1,512], index: 3, kind: output, shape index: {}]
  %s4 = sld [smem:[#allocation0]]
  $region34: #{tpu_custom_call.1} parent=0
    _
  %s6 = ssub.s32 1, %s4
  %s7 = scalar_select 0, %s6, %s4
  $region1: #{tpu_custom_call.1} parent=0
    #allocation2 [shape = 'u8[512]{0}', space=vmem, size = 0x400, scoped, tag = 'input window, operand 0, single buffered']
    #allocation3 [shape = 's32[1]{0}', space=sflag, size = 0x4, scoped, tag = 'scoped memory for tpu_custom_call.1']
    #allocation4 [shape = 's32[1]{0}', space=sflag, size = 0x4, scoped, tag = 'scoped memory for tpu_custom_call.1']
    #allocation5 [shape = 'u8[262144]{0}', space=vmem, size = 0x40000, scoped, tag = 'input window, operand 1, single buffered']
    #allocation6 [shape = 's32[1]{0}', space=sflag, size = 0x4, scoped, tag = 'scoped memory for tpu_custom_call.1']
    #allocation7 [shape = 'u8[2048]{0}', space=vmem, size = 0x800, scoped, tag = 'input window, operand 2, single buffered']
    #allocation8 [shape = 'u8[2048]{0}', space=vmem, size = 0x800, scoped, tag = 'output window, operand 0, single buffered']
    %8 = vsyncpa [#allocation3], 0
    %9 = vsyncpa [#allocation6], 0
    %10 = vsyncpa [#allocation4], 0
    // Predicated region
    $region2: #{tpu_custom_call.1} parent=1 // pred_check
      _
    $region3: #{tpu_custom_call.1} parent=1 // pred_check_branch
      %12 = sbr.rel (0) target = $region5
    $region4: #{tpu_custom_call.1} parent=1 // pred_region
      %14 = vsyncadd [#allocation3], 0
      %s16 = sshll.u32 %s0, 4
      %s17 = int_to_ptr.hbm [resolvable:$true] %s16
      %s18 = sshll.u32 [#allocation2], 4
      %s19 = int_to_ptr.vmem [resolvable:$true] %s18
      %21 = dma.hbm_to_vmem [thread:$0]  %s17, 16, %s19, [#allocation3]
    $region5: #{tpu_custom_call.1} parent=1 // pred_fallthru
      _
    // Predicated region
    $region6: #{tpu_custom_call.1} parent=1 // pred_check
      _
    $region7: #{tpu_custom_call.1} parent=1 // pred_check_branch
      %23 = sbr.rel (0) target = $region9
    $region8: #{tpu_custom_call.1} parent=1 // pred_region
      %25 = vsyncadd [#allocation6], 0
      %s26 = sshll.u32 %s1, 4
      %s27 = int_to_ptr.hbm [resolvable:$true] %s26
      %s28 = sshll.u32 [#allocation5], 4
      %s29 = int_to_ptr.vmem [resolvable:$true] %s28
      %34 = dma.hbm_to_vmem [thread:$0]  %s27, 8192, %s29, [#allocation6], 512, 512, 32
    $region9: #{tpu_custom_call.1} parent=1 // pred_fallthru
      _
    // Predicated region
    $region10: #{tpu_custom_call.1} parent=1 // pred_check
      _
    $region11: #{tpu_custom_call.1} parent=1 // pred_check_branch
      %36 = sbr.rel (0) target = $region13
    $region12: #{tpu_custom_call.1} parent=1 // pred_region
      %38 = vsyncadd [#allocation6], 0
      %s40 = sshll.u32 %s2, 4
      %s41 = int_to_ptr.hbm [resolvable:$true] %s40
      %s42 = sshll.u32 [#allocation7], 4
      %s43 = int_to_ptr.vmem [resolvable:$true] %s42
      %45 = dma.hbm_to_vmem [thread:$0]  %s41, 64, %s43, [#allocation6]
    $region13: #{tpu_custom_call.1} parent=1 // pred_fallthru
      _
    // Predicated region
    $region14: #{tpu_custom_call.1} parent=1 // pred_check
      _
    $region15: #{tpu_custom_call.1} parent=1 // pred_check_branch
      %47 = sbr.rel (0) target = $region17
    $region16: #{tpu_custom_call.1} parent=1 // pred_region
      %49 = dma.done [#allocation3], 16
    $region17: #{tpu_custom_call.1} parent=1 // pred_fallthru
      _
    // Predicated region
    $region18: #{tpu_custom_call.1} parent=1 // pred_check
      _
    $region19: #{tpu_custom_call.1} parent=1 // pred_check_branch
      %51 = sbr.rel (0) target = $region21
    $region20: #{tpu_custom_call.1} parent=1 // pred_region
      %53 = dma.done [#allocation6], 8192
    $region21: #{tpu_custom_call.1} parent=1 // pred_fallthru
      _
    // Predicated region
    $region22: #{tpu_custom_call.1} parent=1 // pred_check
      _
    $region23: #{tpu_custom_call.1} parent=1 // pred_check_branch
      %55 = sbr.rel (0) target = $region25
    $region24: #{tpu_custom_call.1} parent=1 // pred_region
      %57 = dma.done [#allocation6], 64
    $region25: #{tpu_custom_call.1} parent=1 // pred_fallthru
      _
    %v58 = vld [vmem:[#allocation2] sm:$0x1]
    %v59 = vld [vmem:[#allocation5] sm:$0xff]
    %v60 = vld [vmem:[#allocation5 + $0x8] sm:$0xff]
    %v61 = vld [vmem:[#allocation5 + $0x10] sm:$0xff]
    %v62 = vld [vmem:[#allocation5 + $0x18] sm:$0xff]
    %v63 = vld [vmem:[#allocation5 + $0x20] sm:$0xff]
    %v64 = vld [vmem:[#allocation5 + $0x28] sm:$0xff]
    %v65 = vld [vmem:[#allocation5 + $0x30] sm:$0xff]
    %v66 = vld [vmem:[#allocation5 + $0x38] sm:$0xff]
    %v67 = vld [vmem:[#allocation5 + $0x40] sm:$0xff]
    %v68 = vld [vmem:[#allocation5 + $0x48] sm:$0xff]
    %v69 = vld [vmem:[#allocation5 + $0x50] sm:$0xff]
    %v70 = vld [vmem:[#allocation5 + $0x58] sm:$0xff]
    %v71 = vld [vmem:[#allocation5 + $0x60] sm:$0xff]
    %v72 = vld [vmem:[#allocation5 + $0x68] sm:$0xff]
    %v73 = vld [vmem:[#allocation5 + $0x70] sm:$0xff]
    %v74 = vld [vmem:[#allocation5 + $0x78] sm:$0xff]
    %v75 = vld [vmem:[#allocation5 + $0x80] sm:$0xff]
    %v76 = vld [vmem:[#allocation5 + $0x88] sm:$0xff]
    %v77 = vld [vmem:[#allocation5 + $0x90] sm:$0xff]
    %v78 = vld [vmem:[#allocation5 + $0x98] sm:$0xff]
    %v79 = vld [vmem:[#allocation5 + $0xa0] sm:$0xff]
    %v80 = vld [vmem:[#allocation5 + $0xa8] sm:$0xff]
    %v81 = vld [vmem:[#allocation5 + $0xb0] sm:$0xff]
    %v82 = vld [vmem:[#allocation5 + $0xb8] sm:$0xff]
    %v83 = vld [vmem:[#allocation5 + $0xc0] sm:$0xff]
    %v84 = vld [vmem:[#allocation5 + $0xc8] sm:$0xff]
    %v85 = vld [vmem:[#allocation5 + $0xd0] sm:$0xff]
    %v86 = vld [vmem:[#allocation5 + $0xd8] sm:$0xff]
    %v87 = vld [vmem:[#allocation5 + $0xe0] sm:$0xff]
    %v88 = vld [vmem:[#allocation5 + $0xe8] sm:$0xff]
    %v89 = vld [vmem:[#allocation5 + $0xf0] sm:$0xff]
    %v90 = vld [vmem:[#allocation5 + $0xf8] sm:$0xff]
    %v91 = vld [vmem:[#allocation5 + $0x100] sm:$0xff]
    %v92 = vld [vmem:[#allocation5 + $0x108] sm:$0xff]
    %v93 = vld [vmem:[#allocation5 + $0x110] sm:$0xff]
    %v94 = vld [vmem:[#allocation5 + $0x118] sm:$0xff]
    %v95 = vld [vmem:[#allocation5 + $0x120] sm:$0xff]
    %v96 = vld [vmem:[#allocation5 + $0x128] sm:$0xff]
    %v97 = vld [vmem:[#allocation5 + $0x130] sm:$0xff]
    %v98 = vld [vmem:[#allocation5 + $0x138] sm:$0xff]
    %v99 = vld [vmem:[#allocation5 + $0x140] sm:$0xff]
    %v100 = vld [vmem:[#allocation5 + $0x148] sm:$0xff]
    %v101 = vld [vmem:[#allocation5 + $0x150] sm:$0xff]
    %v102 = vld [vmem:[#allocation5 + $0x158] sm:$0xff]
    %v103 = vld [vmem:[#allocation5 + $0x160] sm:$0xff]
    %v104 = vld [vmem:[#allocation5 + $0x168] sm:$0xff]
    %v105 = vld [vmem:[#allocation5 + $0x170] sm:$0xff]
    %v106 = vld [vmem:[#allocation5 + $0x178] sm:$0xff]
    %v107 = vld [vmem:[#allocation5 + $0x180] sm:$0xff]
    %v108 = vld [vmem:[#allocation5 + $0x188] sm:$0xff]
    %v109 = vld [vmem:[#allocation5 + $0x190] sm:$0xff]
    %v110 = vld [vmem:[#allocation5 + $0x198] sm:$0xff]
    %v111 = vld [vmem:[#allocation5 + $0x1a0] sm:$0xff]
    %v112 = vld [vmem:[#allocation5 + $0x1a8] sm:$0xff]
    %v113 = vld [vmem:[#allocation5 + $0x1b0] sm:$0xff]
    %v114 = vld [vmem:[#allocation5 + $0x1b8] sm:$0xff]
    %v115 = vld [vmem:[#allocation5 + $0x1c0] sm:$0xff]
    %v116 = vld [vmem:[#allocation5 + $0x1c8] sm:$0xff]
    %v117 = vld [vmem:[#allocation5 + $0x1d0] sm:$0xff]
    %v118 = vld [vmem:[#allocation5 + $0x1d8] sm:$0xff]
    %v119 = vld [vmem:[#allocation5 + $0x1e0] sm:$0xff]
    %v120 = vld [vmem:[#allocation5 + $0x1e8] sm:$0xff]
    %v121 = vld [vmem:[#allocation5 + $0x1f0] sm:$0xff]
    %v122 = vld [vmem:[#allocation5 + $0x1f8] sm:$0xff]
    %v123 = vld [vmem:[#allocation7] sm:$0xf]
    %v125 = vperm.slane %v123, 0
    %v126 = vperm.slane %v123, 1
    %v127 = vperm.slane %v123, 2
    %v128 = vperm.slane %v123, 3
    %133 = vmatpush.msra.mxu0 %v119
    %134 = vmatpush.msra.mxu0 %v115
    %135 = vmatpush.msra.mxu0 %v111
    %136 = vmatpush.msra.mxu0 %v107
    %137 = vmatpush.msra.mxu0 %v103
    %138 = vmatpush.msra.mxu0 %v99
    %139 = vmatpush.msra.mxu0 %v95
    %140 = vmatpush.msra.mxu0 %v91
    %141 = vmatpush.msra.mxu0 %v87
    %142 = vmatpush.msra.mxu0 %v83
    %143 = vmatpush.msra.mxu0 %v79
    %144 = vmatpush.msra.mxu0 %v75
    %145 = vmatpush.msra.mxu0 %v71
    %146 = vmatpush.msra.mxu0 %v67
    %147 = vmatpush.msra.mxu0 %v63
    %148 = vmatpush.msra.mxu0 %v59
    %149 = vmatmul.f32.gmra.mxu0 %v58
    %v150 = vpop.f32.mrf.mxu0
    %v151 = vadd.f32 %v125, %v150
    %152 = vdwg.mxu0
    %153 = vmatpush.msra.mxu0 %v120
    %154 = vmatpush.msra.mxu0 %v116
    %155 = vmatpush.msra.mxu0 %v112
    %156 = vmatpush.msra.mxu0 %v108
    %157 = vmatpush.msra.mxu0 %v104
    %158 = vmatpush.msra.mxu0 %v100
    %159 = vmatpush.msra.mxu0 %v96
    %160 = vmatpush.msra.mxu0 %v92
    %161 = vmatpush.msra.mxu0 %v88
    %162 = vmatpush.msra.mxu0 %v84
    %163 = vmatpush.msra.mxu0 %v80
    %164 = vmatpush.msra.mxu0 %v76
    %165 = vmatpush.msra.mxu0 %v72
    %166 = vmatpush.msra.mxu0 %v68
    %167 = vmatpush.msra.mxu0 %v64
    %168 = vmatpush.msra.mxu0 %v60
    %169 = vmatmul.f32.gmra.mxu0 %v58
    %v170 = vpop.f32.mrf.mxu0
    %v171 = vadd.f32 %v126, %v170
    %172 = vdwg.mxu0
    %173 = vmatpush.msra.mxu0 %v121
    %174 = vmatpush.msra.mxu0 %v117
    %175 = vmatpush.msra.mxu0 %v113
    %176 = vmatpush.msra.mxu0 %v109
    %177 = vmatpush.msra.mxu0 %v105
    %178 = vmatpush.msra.mxu0 %v101
    %179 = vmatpush.msra.mxu0 %v97
    %180 = vmatpush.msra.mxu0 %v93
    %181 = vmatpush.msra.mxu0 %v89
    %182 = vmatpush.msra.mxu0 %v85
    %183 = vmatpush.msra.mxu0 %v81
    %184 = vmatpush.msra.mxu0 %v77
    %185 = vmatpush.msra.mxu0 %v73
    %186 = vmatpush.msra.mxu0 %v69
    %187 = vmatpush.msra.mxu0 %v65
    %188 = vmatpush.msra.mxu0 %v61
    %189 = vmatmul.f32.gmra.mxu0 %v58
    %v190 = vpop.f32.mrf.mxu0
    %v191 = vadd.f32 %v127, %v190
    %192 = vdwg.mxu0
    %193 = vmatpush.msra.mxu0 %v122
    %194 = vmatpush.msra.mxu0 %v118
    %195 = vmatpush.msra.mxu0 %v114
    %196 = vmatpush.msra.mxu0 %v110
    %197 = vmatpush.msra.mxu0 %v106
    %198 = vmatpush.msra.mxu0 %v102
    %199 = vmatpush.msra.mxu0 %v98
    %200 = vmatpush.msra.mxu0 %v94
    %201 = vmatpush.msra.mxu0 %v90
    %202 = vmatpush.msra.mxu0 %v86
    %203 = vmatpush.msra.mxu0 %v82
    %204 = vmatpush.msra.mxu0 %v78
    %205 = vmatpush.msra.mxu0 %v74
    %206 = vmatpush.msra.mxu0 %v70
    %207 = vmatpush.msra.mxu0 %v66
    %208 = vmatpush.msra.mxu0 %v62
    %209 = vmatmul.f32.gmra.mxu0 %v58
    %v210 = vpop.f32.mrf.mxu0
    %v211 = vadd.f32 %v128, %v210
    %212 = vdwg.mxu0
    %v213 = vand.u32 2147483647, %v151
    %vm214 = vcmp.le.f32.partialorder %v213, 0.7853982
    %vm215 = vcmp.lt.s32.totalorder %v151, 0
    %v216 = vand.u32 %v151, 2139095040
    %v217 = vshrl.u32 %v216, 23
    %v218 = vsub.s32 %v217, 127
    %v219 = vand.u32 2147483647, %v151
    %v220 = vand.u32 %v219, 8388607
    %v221 = vor.u32 %v220, 8388608
    %v222 = vsub.s32 0, %v221
    %v223 = vadd.s32 %v218, 1
    %vm224 = vcmp.gt.s32.totalorder %v223, 0
    %v225 = vsel %vm224, %v223, 0
    %v226 = vshrl.u32 %v225, 5
    %v227 = vand.u32 %v225, 31
    %v228 = vsub.s32 32, %v227
    %v229 = vshrl.u32 683565275, %v228
    %v230 = vshll.u32 683565275, %v227
    %v231 = vshrl.u32 2475754826, %v228
    %v232 = vor.u32 %v230, %v231
    %v233 = vshll.u32 2475754826, %v227
    %v234 = vshrl.u32 2131351028, %v228
    %v235 = vor.u32 %v233, %v234
    %v236 = vshll.u32 2131351028, %v227
    %v237 = vshrl.u32 2102212464, %v228
    %v238 = vor.u32 %v236, %v237
    %v239 = vshll.u32 2102212464, %v227
    %v240 = vshrl.u32 920167782, %v228
    %v241 = vor.u32 %v239, %v240
    %v242 = vshll.u32 920167782, %v227
    %v243 = vshrl.u32 1326507024, %v228
    %v244 = vor.u32 %v242, %v243
    %vm245 = vcmp.lt.s32.totalorder %v226, 1
    %vm246 = vcmp.lt.s32.totalorder %v226, 2
    %vm247 = vcmp.lt.s32.totalorder %v226, 3
    %vm248 = vcmp.lt.s32.totalorder %v226, 4
    %v249 = vsel %vm245, %v229, %v232
    %v250 = vsel %vm248, %v238, 2102212464
    %v251 = vsel %vm247, %v235, %v250
    %v252 = vsel %vm246, %v249, %v251
    %v253 = vsel %vm245, %v232, %v235
    %v254 = vsel %vm248, %v241, 920167782
    %v255 = vsel %vm247, %v238, %v254
    %v256 = vsel %vm246, %v253, %v255
    %v257 = vsel %vm245, %v235, %v238
    %v258 = vsel %vm248, %v244, 1326507024
    %v259 = vsel %vm247, %v241, %v258
    %v260 = vsel %vm246, %v257, %v259
    %v261 = vshll.u32 %v221, 8
    %v262 = vand.u32 %v261, 65535
    %v263 = vshrl.u32 %v261, 16
    %v264 = vand.u32 %v260, 65535
    %v265 = vshrl.u32 %v260, 16
    %v266 = vmul.u32 %v262, %v264
    %v267 = vmul.u32 %v262, %v265
    %v268 = vmul.u32 %v263, %v264
    %v269 = vmul.u32 %v263, %v265
    %v270 = vshll.u32 %v267, 16
    %v271 = vshrl.u32 %v267, 16
    %v272 = vshll.u32 %v268, 16
    %v273 = vshrl.u32 %v268, 16
    %vm274 = vc.u32 %v266, %v270
    %v275 = vsel %vm274, 1, 0
    %v276 = vadd.s32 %v266, %v270
    %v277 = vadd.s32 %v269, %v275
    %vm278 = vc.u32 %v276, %v272
    %v279 = vsel %vm278, 1, 0
    %v280 = vadd.s32 %v276, %v272
    %v281 = vadd.s32 %v277, %v279
    %v282 = vadd.s32 %v281, %v271
    %v283 = vadd.s32 %v282, %v273
    %v284 = vand.u32 %v261, 65535
    %v285 = vshrl.u32 %v261, 16
    %v286 = vand.u32 %v256, 65535
    %v287 = vshrl.u32 %v256, 16
    %v288 = vmul.u32 %v284, %v286
    %v289 = vmul.u32 %v284, %v287
    %v290 = vmul.u32 %v285, %v286
    %v291 = vmul.u32 %v285, %v287
    %v292 = vshll.u32 %v289, 16
    %v293 = vshrl.u32 %v289, 16
    %v294 = vshll.u32 %v290, 16
    %v295 = vshrl.u32 %v290, 16
    %vm296 = vc.u32 %v288, %v292
    %v297 = vsel %vm296, 1, 0
    %v298 = vadd.s32 %v288, %v292
    %v299 = vadd.s32 %v291, %v297
    %vm300 = vc.u32 %v298, %v294
    %v301 = vsel %vm300, 1, 0
    %v302 = vadd.s32 %v298, %v294
    %v303 = vadd.s32 %v299, %v301
    %v304 = vadd.s32 %v303, %v293
    %v305 = vadd.s32 %v304, %v295
    %v306 = vmul.u32 %v261, %v252
    %v307 = vadd.s32 %v283, %v302
    %vm308 = vc.u32 %v283, %v302
    %v309 = vadd.s32 %v305, 1
    %v310 = vsel %vm308, %v309, %v305
    %v311 = vadd.s32 %v306, %v310
    %v312 = vadd.s32 %v311, 536870912
    %v313 = vshrl.u32 %v312, 30
    %v314 = vshll.u32 %v313, 30
    %v315 = vsub.s32 %v311, %v314
    %vm316 = vcmp.lt.s32.totalorder %v315, 0
    %v317 = vsub.s32 0, %v315
    %v318 = vsel %vm316, %v317, %v315
    %v319 = vclz %v318
    %v320 = vsub.s32 %v319, 2
    %vm321 = vcmp.gt.s32.totalorder 0, %v320
    %v322 = vsel %vm321, 0, %v320
    %v323 = vsub.s32 32, %v322
    %v324 = vshll.u32 %v315, %v322
    %v325 = vshrl.u32 %v307, %v323
    %v326 = vor.u32 %v324, %v325
    %v327 = vsub.s32 4294967266, %v322
    %v328 = vadd.s32 %v327, 127
    %v329 = vshll.u32 %v328, 23
    %v330 = vor.u32 4788187, %v329
    %v331 = vand.u32 2147483647, %v330
    %v333 = vcvt.s32.f32 %v326
    %v334 = vmul.f32 %v333, %v331
    %v335 = vxor.u32 %v334, 2147483648
    %v336 = vsel %vm215, %v335, %v334
    %v337 = vsub.s32 4, %v313
    %v338 = vsel %vm215, %v337, %v313
    %v339 = vsel %vm214, %v151, %v336
    %v340 = vsel %vm214, 0, %v338
    %v341 = vmul.f32 %v339, %v339
    %v342 = vmul.f32 %v341, -0.001358992
    %v343 = vadd.f32 %v342, 0.041655596
    %v344 = vmul.f32 %v341, %v343
    %v345 = vadd.f32 %v344, -0.4999988
    %v346 = vmul.f32 %v341, %v345
    %v347 = vadd.f32 1.0, %v346
    %v348 = vmul.f32 %v339, %v339
    %v349 = vmul.f32 %v348, -0.00019511016
    %v350 = vadd.f32 %v349, 0.008332121
    %v351 = vmul.f32 %v348, %v350
    %v352 = vadd.f32 %v351, -0.16666654
    %v353 = vmul.f32 %v348, %v352
    %v354 = vadd.f32 %v353, 1.0
    %v355 = vmul.f32 %v354, %v339
    %vm356 = vweird.f32 %v151
    %v357 = vadd.s32 %v340, 3
    %v358 = vand.u32 %v357, 3
    %vm359 = vcmp.lt.s32.totalorder %v358, 2
    %vm360 = vcmp.eq.s32.totalorder %v358, 0
    %v361 = vxor.u32 %v355, 2147483648
    %v362 = vsel %vm360, %v347, %v361
    %vm363 = vcmp.eq.s32.totalorder %v358, 2
    %v364 = vxor.u32 %v347, 2147483648
    %v365 = vsel %vm363, %v364, %v355
    %v366 = vsel %vm359, %v362, %v365
    %v367 = vsel %vm356, nan, %v366
    %v368 = vand.u32 2147483647, %v171
    %vm369 = vcmp.le.f32.partialorder %v368, 0.7853982
    %vm370 = vcmp.lt.s32.totalorder %v171, 0
    %v371 = vand.u32 %v171, 2139095040
    %v372 = vshrl.u32 %v371, 23
    %v373 = vsub.s32 %v372, 127
    %v374 = vand.u32 2147483647, %v171
    %v375 = vand.u32 %v374, 8388607
    %v376 = vor.u32 %v375, 8388608
    %v377 = vsub.s32 0, %v376
    %v378 = vadd.s32 %v373, 1
    %vm379 = vcmp.gt.s32.totalorder %v378, 0
    %v380 = vsel %vm379, %v378, 0
    %v381 = vshrl.u32 %v380, 5
    %v382 = vand.u32 %v380, 31
    %v383 = vsub.s32 32, %v382
    %v384 = vshrl.u32 683565275, %v383
    %v385 = vshll.u32 683565275, %v382
    %v386 = vshrl.u32 2475754826, %v383
    %v387 = vor.u32 %v385, %v386
    %v388 = vshll.u32 2475754826, %v382
    %v389 = vshrl.u32 2131351028, %v383
    %v390 = vor.u32 %v388, %v389
    %v391 = vshll.u32 2131351028, %v382
    %v392 = vshrl.u32 2102212464, %v383
    %v393 = vor.u32 %v391, %v392
    %v394 = vshll.u32 2102212464, %v382
    %v395 = vshrl.u32 920167782, %v383
    %v396 = vor.u32 %v394, %v395
    %v397 = vshll.u32 920167782, %v382
    %v398 = vshrl.u32 1326507024, %v383
    %v399 = vor.u32 %v397, %v398
    %vm400 = vcmp.lt.s32.totalorder %v381, 1
    %vm401 = vcmp.lt.s32.totalorder %v381, 2
    %vm402 = vcmp.lt.s32.totalorder %v381, 3
    %vm403 = vcmp.lt.s32.totalorder %v381, 4
    %v404 = vsel %vm400, %v384, %v387
    %v405 = vsel %vm403, %v393, 2102212464
    %v406 = vsel %vm402, %v390, %v405
    %v407 = vsel %vm401, %v404, %v406
    %v408 = vsel %vm400, %v387, %v390
    %v409 = vsel %vm403, %v396, 920167782
    %v410 = vsel %vm402, %v393, %v409
    %v411 = vsel %vm401, %v408, %v410
    %v412 = vsel %vm400, %v390, %v393
    %v413 = vsel %vm403, %v399, 1326507024
    %v414 = vsel %vm402, %v396, %v413
    %v415 = vsel %vm401, %v412, %v414
    %v416 = vshll.u32 %v376, 8
    %v417 = vand.u32 %v416, 65535
    %v418 = vshrl.u32 %v416, 16
    %v419 = vand.u32 %v415, 65535
    %v420 = vshrl.u32 %v415, 16
    %v421 = vmul.u32 %v417, %v419
    %v422 = vmul.u32 %v417, %v420
    %v423 = vmul.u32 %v418, %v419
    %v424 = vmul.u32 %v418, %v420
    %v425 = vshll.u32 %v422, 16
    %v426 = vshrl.u32 %v422, 16
    %v427 = vshll.u32 %v423, 16
    %v428 = vshrl.u32 %v423, 16
    %vm429 = vc.u32 %v421, %v425
    %v430 = vsel %vm429, 1, 0
    %v431 = vadd.s32 %v421, %v425
    %v432 = vadd.s32 %v424, %v430
    %vm433 = vc.u32 %v431, %v427
    %v434 = vsel %vm433, 1, 0
    %v435 = vadd.s32 %v431, %v427
    %v436 = vadd.s32 %v432, %v434
    %v437 = vadd.s32 %v436, %v426
    %v438 = vadd.s32 %v437, %v428
    %v439 = vand.u32 %v416, 65535
    %v440 = vshrl.u32 %v416, 16
    %v441 = vand.u32 %v411, 65535
    %v442 = vshrl.u32 %v411, 16
    %v443 = vmul.u32 %v439, %v441
    %v444 = vmul.u32 %v439, %v442
    %v445 = vmul.u32 %v440, %v441
    %v446 = vmul.u32 %v440, %v442
    %v447 = vshll.u32 %v444, 16
    %v448 = vshrl.u32 %v444, 16
    %v449 = vshll.u32 %v445, 16
    %v450 = vshrl.u32 %v445, 16
    %vm451 = vc.u32 %v443, %v447
    %v452 = vsel %vm451, 1, 0
    %v453 = vadd.s32 %v443, %v447
    %v454 = vadd.s32 %v446, %v452
    %vm455 = vc.u32 %v453, %v449
    %v456 = vsel %vm455, 1, 0
    %v457 = vadd.s32 %v453, %v449
    %v458 = vadd.s32 %v454, %v456
    %v459 = vadd.s32 %v458, %v448
    %v460 = vadd.s32 %v459, %v450
    %v461 = vmul.u32 %v416, %v407
    %v462 = vadd.s32 %v438, %v457
    %vm463 = vc.u32 %v438, %v457
    %v464 = vadd.s32 %v460, 1
    %v465 = vsel %vm463, %v464, %v460
    %v466 = vadd.s32 %v461, %v465
    %v467 = vadd.s32 %v466, 536870912
    %v468 = vshrl.u32 %v467, 30
    %v469 = vshll.u32 %v468, 30
    %v470 = vsub.s32 %v466, %v469
    %vm471 = vcmp.lt.s32.totalorder %v470, 0
    %v472 = vsub.s32 0, %v470
    %v473 = vsel %vm471, %v472, %v470
    %v474 = vclz %v473
    %v475 = vsub.s32 %v474, 2
    %vm476 = vcmp.gt.s32.totalorder 0, %v475
    %v477 = vsel %vm476, 0, %v475
    %v478 = vsub.s32 32, %v477
    %v479 = vshll.u32 %v470, %v477
    %v480 = vshrl.u32 %v462, %v478
    %v481 = vor.u32 %v479, %v480
    %v482 = vsub.s32 4294967266, %v477
    %v483 = vadd.s32 %v482, 127
    %v484 = vshll.u32 %v483, 23
    %v485 = vor.u32 4788187, %v484
    %v486 = vand.u32 2147483647, %v485
    %v488 = vcvt.s32.f32 %v481
    %v489 = vmul.f32 %v488, %v486
    %v490 = vxor.u32 %v489, 2147483648
    %v491 = vsel %vm370, %v490, %v489
    %v492 = vsub.s32 4, %v468
    %v493 = vsel %vm370, %v492, %v468
    %v494 = vsel %vm369, %v171, %v491
    %v495 = vsel %vm369, 0, %v493
    %v496 = vmul.f32 %v494, %v494
    %v497 = vmul.f32 %v496, -0.001358992
    %v498 = vadd.f32 %v497, 0.041655596
    %v499 = vmul.f32 %v496, %v498
    %v500 = vadd.f32 %v499, -0.4999988
    %v501 = vmul.f32 %v496, %v500
    %v502 = vadd.f32 1.0, %v501
    %v503 = vmul.f32 %v494, %v494
    %v504 = vmul.f32 %v503, -0.00019511016
    %v505 = vadd.f32 %v504, 0.008332121
    %v506 = vmul.f32 %v503, %v505
    %v507 = vadd.f32 %v506, -0.16666654
    %v508 = vmul.f32 %v503, %v507
    %v509 = vadd.f32 %v508, 1.0
    %v510 = vmul.f32 %v509, %v494
    %vm511 = vweird.f32 %v171
    %v512 = vadd.s32 %v495, 3
    %v513 = vand.u32 %v512, 3
    %vm514 = vcmp.lt.s32.totalorder %v513, 2
    %vm515 = vcmp.eq.s32.totalorder %v513, 0
    %v516 = vxor.u32 %v510, 2147483648
    %v517 = vsel %vm515, %v502, %v516
    %vm518 = vcmp.eq.s32.totalorder %v513, 2
    %v519 = vxor.u32 %v502, 2147483648
    %v520 = vsel %vm518, %v519, %v510
    %v521 = vsel %vm514, %v517, %v520
    %v522 = vsel %vm511, nan, %v521
    %v523 = vand.u32 2147483647, %v191
    %vm524 = vcmp.le.f32.partialorder %v523, 0.7853982
    %vm525 = vcmp.lt.s32.totalorder %v191, 0
    %v526 = vand.u32 %v191, 2139095040
    %v527 = vshrl.u32 %v526, 23
    %v528 = vsub.s32 %v527, 127
    %v529 = vand.u32 2147483647, %v191
    %v530 = vand.u32 %v529, 8388607
    %v531 = vor.u32 %v530, 8388608
    %v532 = vsub.s32 0, %v531
    %v533 = vadd.s32 %v528, 1
    %vm534 = vcmp.gt.s32.totalorder %v533, 0
    %v535 = vsel %vm534, %v533, 0
    %v536 = vshrl.u32 %v535, 5
    %v537 = vand.u32 %v535, 31
    %v538 = vsub.s32 32, %v537
    %v539 = vshrl.u32 683565275, %v538
    %v540 = vshll.u32 683565275, %v537
    %v541 = vshrl.u32 2475754826, %v538
    %v542 = vor.u32 %v540, %v541
    %v543 = vshll.u32 2475754826, %v537
    %v544 = vshrl.u32 2131351028, %v538
    %v545 = vor.u32 %v543, %v544
    %v546 = vshll.u32 2131351028, %v537
    %v547 = vshrl.u32 2102212464, %v538
    %v548 = vor.u32 %v546, %v547
    %v549 = vshll.u32 2102212464, %v537
    %v550 = vshrl.u32 920167782, %v538
    %v551 = vor.u32 %v549, %v550
    %v552 = vshll.u32 920167782, %v537
    %v553 = vshrl.u32 1326507024, %v538
    %v554 = vor.u32 %v552, %v553
    %vm555 = vcmp.lt.s32.totalorder %v536, 1
    %vm556 = vcmp.lt.s32.totalorder %v536, 2
    %vm557 = vcmp.lt.s32.totalorder %v536, 3
    %vm558 = vcmp.lt.s32.totalorder %v536, 4
    %v559 = vsel %vm555, %v539, %v542
    %v560 = vsel %vm558, %v548, 2102212464
    %v561 = vsel %vm557, %v545, %v560
    %v562 = vsel %vm556, %v559, %v561
    %v563 = vsel %vm555, %v542, %v545
    %v564 = vsel %vm558, %v551, 920167782
    %v565 = vsel %vm557, %v548, %v564
    %v566 = vsel %vm556, %v563, %v565
    %v567 = vsel %vm555, %v545, %v548
    %v568 = vsel %vm558, %v554, 1326507024
    %v569 = vsel %vm557, %v551, %v568
    %v570 = vsel %vm556, %v567, %v569
    %v571 = vshll.u32 %v531, 8
    %v572 = vand.u32 %v571, 65535
    %v573 = vshrl.u32 %v571, 16
    %v574 = vand.u32 %v570, 65535
    %v575 = vshrl.u32 %v570, 16
    %v576 = vmul.u32 %v572, %v574
    %v577 = vmul.u32 %v572, %v575
    %v578 = vmul.u32 %v573, %v574
    %v579 = vmul.u32 %v573, %v575
    %v580 = vshll.u32 %v577, 16
    %v581 = vshrl.u32 %v577, 16
    %v582 = vshll.u32 %v578, 16
    %v583 = vshrl.u32 %v578, 16
    %vm584 = vc.u32 %v576, %v580
    %v585 = vsel %vm584, 1, 0
    %v586 = vadd.s32 %v576, %v580
    %v587 = vadd.s32 %v579, %v585
    %vm588 = vc.u32 %v586, %v582
    %v589 = vsel %vm588, 1, 0
    %v590 = vadd.s32 %v586, %v582
    %v591 = vadd.s32 %v587, %v589
    %v592 = vadd.s32 %v591, %v581
    %v593 = vadd.s32 %v592, %v583
    %v594 = vand.u32 %v571, 65535
    %v595 = vshrl.u32 %v571, 16
    %v596 = vand.u32 %v566, 65535
    %v597 = vshrl.u32 %v566, 16
    %v598 = vmul.u32 %v594, %v596
    %v599 = vmul.u32 %v594, %v597
    %v600 = vmul.u32 %v595, %v596
    %v601 = vmul.u32 %v595, %v597
    %v602 = vshll.u32 %v599, 16
    %v603 = vshrl.u32 %v599, 16
    %v604 = vshll.u32 %v600, 16
    %v605 = vshrl.u32 %v600, 16
    %vm606 = vc.u32 %v598, %v602
    %v607 = vsel %vm606, 1, 0
    %v608 = vadd.s32 %v598, %v602
    %v609 = vadd.s32 %v601, %v607
    %vm610 = vc.u32 %v608, %v604
    %v611 = vsel %vm610, 1, 0
    %v612 = vadd.s32 %v608, %v604
    %v613 = vadd.s32 %v609, %v611
    %v614 = vadd.s32 %v613, %v603
    %v615 = vadd.s32 %v614, %v605
    %v616 = vmul.u32 %v571, %v562
    %v617 = vadd.s32 %v593, %v612
    %vm618 = vc.u32 %v593, %v612
    %v619 = vadd.s32 %v615, 1
    %v620 = vsel %vm618, %v619, %v615
    %v621 = vadd.s32 %v616, %v620
    %v622 = vadd.s32 %v621, 536870912
    %v623 = vshrl.u32 %v622, 30
    %v624 = vshll.u32 %v623, 30
    %v625 = vsub.s32 %v621, %v624
    %vm626 = vcmp.lt.s32.totalorder %v625, 0
    %v627 = vsub.s32 0, %v625
    %v628 = vsel %vm626, %v627, %v625
    %v629 = vclz %v628
    %v630 = vsub.s32 %v629, 2
    %vm631 = vcmp.gt.s32.totalorder 0, %v630
    %v632 = vsel %vm631, 0, %v630
    %v633 = vsub.s32 32, %v632
    %v634 = vshll.u32 %v625, %v632
    %v635 = vshrl.u32 %v617, %v633
    %v636 = vor.u32 %v634, %v635
    %v637 = vsub.s32 4294967266, %v632
    %v638 = vadd.s32 %v637, 127
    %v639 = vshll.u32 %v638, 23
    %v640 = vor.u32 4788187, %v639
    %v641 = vand.u32 2147483647, %v640
    %v643 = vcvt.s32.f32 %v636
    %v644 = vmul.f32 %v643, %v641
    %v645 = vxor.u32 %v644, 2147483648
    %v646 = vsel %vm525, %v645, %v644
    %v647 = vsub.s32 4, %v623
    %v648 = vsel %vm525, %v647, %v623
    %v649 = vsel %vm524, %v191, %v646
    %v650 = vsel %vm524, 0, %v648
    %v651 = vmul.f32 %v649, %v649
    %v652 = vmul.f32 %v651, -0.001358992
    %v653 = vadd.f32 %v652, 0.041655596
    %v654 = vmul.f32 %v651, %v653
    %v655 = vadd.f32 %v654, -0.4999988
    %v656 = vmul.f32 %v651, %v655
    %v657 = vadd.f32 1.0, %v656
    %v658 = vmul.f32 %v649, %v649
    %v659 = vmul.f32 %v658, -0.00019511016
    %v660 = vadd.f32 %v659, 0.008332121
    %v661 = vmul.f32 %v658, %v660
    %v662 = vadd.f32 %v661, -0.16666654
    %v663 = vmul.f32 %v658, %v662
    %v664 = vadd.f32 %v663, 1.0
    %v665 = vmul.f32 %v664, %v649
    %vm666 = vweird.f32 %v191
    %v667 = vadd.s32 %v650, 3
    %v668 = vand.u32 %v667, 3
    %vm669 = vcmp.lt.s32.totalorder %v668, 2
    %vm670 = vcmp.eq.s32.totalorder %v668, 0
    %v671 = vxor.u32 %v665, 2147483648
    %v672 = vsel %vm670, %v657, %v671
    %vm673 = vcmp.eq.s32.totalorder %v668, 2
    %v674 = vxor.u32 %v657, 2147483648
    %v675 = vsel %vm673, %v674, %v665
    %v676 = vsel %vm669, %v672, %v675
    %v677 = vsel %vm666, nan, %v676
    %v678 = vand.u32 2147483647, %v211
    %vm679 = vcmp.le.f32.partialorder %v678, 0.7853982
    %vm680 = vcmp.lt.s32.totalorder %v211, 0
    %v681 = vand.u32 %v211, 2139095040
    %v682 = vshrl.u32 %v681, 23
    %v683 = vsub.s32 %v682, 127
    %v684 = vand.u32 2147483647, %v211
    %v685 = vand.u32 %v684, 8388607
    %v686 = vor.u32 %v685, 8388608
    %v687 = vsub.s32 0, %v686
    %v688 = vadd.s32 %v683, 1
    %vm689 = vcmp.gt.s32.totalorder %v688, 0
    %v690 = vsel %vm689, %v688, 0
    %v691 = vshrl.u32 %v690, 5
    %v692 = vand.u32 %v690, 31
    %v693 = vsub.s32 32, %v692
    %v694 = vshrl.u32 683565275, %v693
    %v695 = vshll.u32 683565275, %v692
    %v696 = vshrl.u32 2475754826, %v693
    %v697 = vor.u32 %v695, %v696
    %v698 = vshll.u32 2475754826, %v692
    %v699 = vshrl.u32 2131351028, %v693
    %v700 = vor.u32 %v698, %v699
    %v701 = vshll.u32 2131351028, %v692
    %v702 = vshrl.u32 2102212464, %v693
    %v703 = vor.u32 %v701, %v702
    %v704 = vshll.u32 2102212464, %v692
    %v705 = vshrl.u32 920167782, %v693
    %v706 = vor.u32 %v704, %v705
    %v707 = vshll.u32 920167782, %v692
    %v708 = vshrl.u32 1326507024, %v693
    %v709 = vor.u32 %v707, %v708
    %vm710 = vcmp.lt.s32.totalorder %v691, 1
    %vm711 = vcmp.lt.s32.totalorder %v691, 2
    %vm712 = vcmp.lt.s32.totalorder %v691, 3
    %vm713 = vcmp.lt.s32.totalorder %v691, 4
    %v714 = vsel %vm710, %v694, %v697
    %v715 = vsel %vm713, %v703, 2102212464
    %v716 = vsel %vm712, %v700, %v715
    %v717 = vsel %vm711, %v714, %v716
    %v718 = vsel %vm710, %v697, %v700
    %v719 = vsel %vm713, %v706, 920167782
    %v720 = vsel %vm712, %v703, %v719
    %v721 = vsel %vm711, %v718, %v720
    %v722 = vsel %vm710, %v700, %v703
    %v723 = vsel %vm713, %v709, 1326507024
    %v724 = vsel %vm712, %v706, %v723
    %v725 = vsel %vm711, %v722, %v724
    %v726 = vshll.u32 %v686, 8
    %v727 = vand.u32 %v726, 65535
    %v728 = vshrl.u32 %v726, 16
    %v729 = vand.u32 %v725, 65535
    %v730 = vshrl.u32 %v725, 16
    %v731 = vmul.u32 %v727, %v729
    %v732 = vmul.u32 %v727, %v730
    %v733 = vmul.u32 %v728, %v729
    %v734 = vmul.u32 %v728, %v730
    %v735 = vshll.u32 %v732, 16
    %v736 = vshrl.u32 %v732, 16
    %v737 = vshll.u32 %v733, 16
    %v738 = vshrl.u32 %v733, 16
    %vm739 = vc.u32 %v731, %v735
    %v740 = vsel %vm739, 1, 0
    %v741 = vadd.s32 %v731, %v735
    %v742 = vadd.s32 %v734, %v740
    %vm743 = vc.u32 %v741, %v737
    %v744 = vsel %vm743, 1, 0
    %v745 = vadd.s32 %v741, %v737
    %v746 = vadd.s32 %v742, %v744
    %v747 = vadd.s32 %v746, %v736
    %v748 = vadd.s32 %v747, %v738
    %v749 = vand.u32 %v726, 65535
    %v750 = vshrl.u32 %v726, 16
    %v751 = vand.u32 %v721, 65535
    %v752 = vshrl.u32 %v721, 16
    %v753 = vmul.u32 %v749, %v751
    %v754 = vmul.u32 %v749, %v752
    %v755 = vmul.u32 %v750, %v751
    %v756 = vmul.u32 %v750, %v752
    %v757 = vshll.u32 %v754, 16
    %v758 = vshrl.u32 %v754, 16
    %v759 = vshll.u32 %v755, 16
    %v760 = vshrl.u32 %v755, 16
    %vm761 = vc.u32 %v753, %v757
    %v762 = vsel %vm761, 1, 0
    %v763 = vadd.s32 %v753, %v757
    %v764 = vadd.s32 %v756, %v762
    %vm765 = vc.u32 %v763, %v759
    %v766 = vsel %vm765, 1, 0
    %v767 = vadd.s32 %v763, %v759
    %v768 = vadd.s32 %v764, %v766
    %v769 = vadd.s32 %v768, %v758
    %v770 = vadd.s32 %v769, %v760
    %v771 = vmul.u32 %v726, %v717
    %v772 = vadd.s32 %v748, %v767
    %vm773 = vc.u32 %v748, %v767
    %v774 = vadd.s32 %v770, 1
    %v775 = vsel %vm773, %v774, %v770
    %v776 = vadd.s32 %v771, %v775
    %v777 = vadd.s32 %v776, 536870912
    %v778 = vshrl.u32 %v777, 30
    %v779 = vshll.u32 %v778, 30
    %v780 = vsub.s32 %v776, %v779
    %vm781 = vcmp.lt.s32.totalorder %v780, 0
    %v782 = vsub.s32 0, %v780
    %v783 = vsel %vm781, %v782, %v780
    %v784 = vclz %v783
    %v785 = vsub.s32 %v784, 2
    %vm786 = vcmp.gt.s32.totalorder 0, %v785
    %v787 = vsel %vm786, 0, %v785
    %v788 = vsub.s32 32, %v787
    %v789 = vshll.u32 %v780, %v787
    %v790 = vshrl.u32 %v772, %v788
    %v791 = vor.u32 %v789, %v790
    %v792 = vsub.s32 4294967266, %v787
    %v793 = vadd.s32 %v792, 127
    %v794 = vshll.u32 %v793, 23
    %v795 = vor.u32 4788187, %v794
    %v796 = vand.u32 2147483647, %v795
    %v798 = vcvt.s32.f32 %v791
    %v799 = vmul.f32 %v798, %v796
    %v800 = vxor.u32 %v799, 2147483648
    %v801 = vsel %vm680, %v800, %v799
    %v802 = vsub.s32 4, %v778
    %v803 = vsel %vm680, %v802, %v778
    %v804 = vsel %vm679, %v211, %v801
    %v805 = vsel %vm679, 0, %v803
    %v806 = vmul.f32 %v804, %v804
    %v807 = vmul.f32 %v806, -0.001358992
    %v808 = vadd.f32 %v807, 0.041655596
    %v809 = vmul.f32 %v806, %v808
    %v810 = vadd.f32 %v809, -0.4999988
    %v811 = vmul.f32 %v806, %v810
    %v812 = vadd.f32 1.0, %v811
    %v813 = vmul.f32 %v804, %v804
    %v814 = vmul.f32 %v813, -0.00019511016
    %v815 = vadd.f32 %v814, 0.008332121
    %v816 = vmul.f32 %v813, %v815
    %v817 = vadd.f32 %v816, -0.16666654
    %v818 = vmul.f32 %v813, %v817
    %v819 = vadd.f32 %v818, 1.0
    %v820 = vmul.f32 %v819, %v804
    %vm821 = vweird.f32 %v211
    %v822 = vadd.s32 %v805, 3
    %v823 = vand.u32 %v822, 3
    %vm824 = vcmp.lt.s32.totalorder %v823, 2
    %vm825 = vcmp.eq.s32.totalorder %v823, 0
    %v826 = vxor.u32 %v820, 2147483648
    %v827 = vsel %vm825, %v812, %v826
    %vm828 = vcmp.eq.s32.totalorder %v823, 2
    %v829 = vxor.u32 %v812, 2147483648
    %v830 = vsel %vm828, %v829, %v820
    %v831 = vsel %vm824, %v827, %v830
    %v832 = vsel %vm821, nan, %v831
    %v837 = vrot.slane %v522, 7
    %v838 = vrot.slane %v677, 6
    %v839 = vrot.slane %v832, 5
    %vm840 = vcmask 1040384
    %v841 = vsel %vm840, %v367, %v837
    %vm842 = vcmask 1042434
    %v843 = vsel %vm842, %v838, %v839
    %vm844 = vcmask 1041408
    %v845 = vsel %vm844, %v841, %v843
    %v847 = vlaneseq
    %vm848 = vcmp.ge.s32.totalorder %v847, 0
    %vm849 = vcmp.lt.s32.totalorder %v847, 512
    %vm850 = vmand %vm848, %vm849
    %851 = vst.msk [vmem:[#allocation8] sm:$0xf] %vm850, %v845
    // Predicated region
    $region26: #{tpu_custom_call.1} parent=1 // pred_check
      _
    $region27: #{tpu_custom_call.1} parent=1 // pred_check_branch
      %853 = sbr.rel (0) target = $region29
    $region28: #{tpu_custom_call.1} parent=1 // pred_region
      %855 = vsyncadd [#allocation4], 0
      %s857 = sshll.u32 [#allocation8], 4
      %s858 = int_to_ptr.vmem [resolvable:$true] %s857
      %s859 = sshll.u32 %s3, 4
      %s860 = int_to_ptr.hbm [resolvable:$true] %s859
      %862 = dma.vmem_to_hbm [thread:$0]  %s858, 64, %s860, [#allocation4]
    $region29: #{tpu_custom_call.1} parent=1 // pred_fallthru
      _
    // Predicated region
    $region30: #{tpu_custom_call.1} parent=1 // pred_check
      _
    $region31: #{tpu_custom_call.1} parent=1 // pred_check_branch
      %864 = sbr.rel (0) target = $region33
    $region32: #{tpu_custom_call.1} parent=1 // pred_region
      %866 = dma.done [#allocation4], 64
    $region33: #{tpu_custom_call.1} parent=1 // pred_fallthru
      _
    %867 = vsyncpa [#allocation3], 1
    %868 = vsyncpa [#allocation6], 1
    %869 = vsyncpa [#allocation4], 1

</llo_original>
